<compile_context>
chip_gen: v7x
topology: tpu7x:2x2x1
jax: 0.10.0
libtpu: 0.0.40
codegen_flags: <defaults>
</compile_context>

<pallas_src>
import jax
import jax.numpy as jnp
from jax.experimental import pallas as pl
from jax.experimental.pallas import tpu as pltpu

FEAT = 10                  # nn.Linear(10, 10)
G = 64                     # logical rows packed per lane-dense row (64*10 = 640 = 5*128)
PACK = G * FEAT            # 640 lanes -> unmasked, full-width stores
MIN_TBP = 64               # below this many packed rows: one full-array tile
MAX_TBP = 2048             # packed rows per tile (~5 MiB f32 per x/out tile)
PALLAS_MIN_BATCH = 4096    # below this many logical rows a plain XLA dot wins


def _packed_linear_kernel(x_ref, w_ref, b_ref, o_ref):
    # x_ref: [TBP, 640]   w_ref: [640, 640] block-diagonal   b_ref: [1, 640]
    o_ref[...] = (
        jnp.dot(x_ref[...], w_ref[...], preferred_element_type=jnp.float32)
        + b_ref[...]
    ).astype(o_ref.dtype)


def _fuse_params(weights, biases):
    wa, wb, wc, wd, we = weights
    ba, bb, bc, bd, be = biases
    # NOTE: fusing changes f32 summation order vs. the reference (within 1e-5).
    w_eff = (wa + 2.0 * wb + wc + wd + we).T                  # [in, out]
    b_eff = (ba + 2.0 * bb + bc + bd + be).reshape(1, FEAT)   # [1, out]
    return w_eff, b_eff


def _choose_packed_tile(n_rows):
    """Packed-row tile: big enough to amortize per-step overhead, small enough
    for v7x's 64 MiB VMEM, and giving >= 4 grid steps when there is work so
    the two v7x TensorCores both get a share."""
    if n_rows <= MIN_TBP:
        return n_rows                                   # single full-array tile
    steps = max(4, pl.cdiv(n_rows, MAX_TBP))
    tile = pl.cdiv(n_rows, steps)
    tile = ((tile + 7) // 8) * 8                        # sublane multiple
    return max(8, min(tile, MAX_TBP))


def my_module_forward(x, weights, biases, *, force_pallas=False):
    """x: [B, 10] float32; weights: 5 x [10, 10]; biases: 5 x [1, 10]."""
    B = x.shape[0]
    w_eff, b_eff = _fuse_params(weights, biases)

    # Small-batch bypass: pallas_call launch/pipeline setup dwarfs ~2*B*100 FLOPs.
    if B < PALLAS_MIN_BATCH and not force_pallas:
        return jnp.dot(x, w_eff, preferred_element_type=jnp.float32) + b_eff

    # ---- lane-dense packing (free metadata reshape of a contiguous array) ----
    b_pad = (-B) % G
    x_p = jnp.pad(x, ((0, b_pad), (0, 0))) if b_pad else x
    n_rows = (B + b_pad) // G
    x_packed = x_p.reshape(n_rows, PACK)                         # [B/G, 640]

    w_block = jnp.kron(jnp.eye(G, dtype=w_eff.dtype), w_eff)     # [640, 640]
    b_block = jnp.tile(b_eff, (1, G))                            # [1, 640]

    tbp = _choose_packed_tile(n_rows)
    grid = (pl.cdiv(n_rows, tbp),)

    # VMEM budget: x/out double-buffered + (double-buffered) resident weight.
    vmem_need = 2 * 2 * tbp * PACK * 4 + 2 * PACK * PACK * 4 + (1 << 16)
    vmem_limit = min(max(int(vmem_need * 1.5), 16 << 20), 48 << 20)

    cost = pl.CostEstimate(
        flops=2 * n_rows * PACK * PACK,
        transcendentals=0,
        bytes_accessed=(2 * n_rows * PACK + PACK * PACK + PACK) * 4,
    )

    out_packed = pl.pallas_call(
        _packed_linear_kernel,
        out_shape=jax.ShapeDtypeStruct((n_rows, PACK), jnp.float32),
        grid=grid,
        in_specs=[
            pl.BlockSpec((tbp, PACK), lambda i: (i, 0)),       # x: streamed over packed batch
            pl.BlockSpec((PACK, PACK), lambda i: (0, 0)),      # W_block: resident
            pl.BlockSpec((1, PACK), lambda i: (0, 0)),         # bias: resident
        ],
        out_specs=pl.BlockSpec((tbp, PACK), lambda i: (i, 0)),
        compiler_params=pltpu.CompilerParams(
            dimension_semantics=("parallel",),                 # megacore batch sharding
            vmem_limit_bytes=vmem_limit,
        ),
        cost_estimate=cost,
    )(x_packed, w_block, b_block)

    out = out_packed.reshape(n_rows * G, FEAT)
    return out[:B] if b_pad else out


def _reference(x, weights, biases):
    """Literal translation of the PyTorch forward (unfused)."""
    def lin(w, b):
        return x @ w.T + b
    a, b, c, d, e = (lin(w, bb) for w, bb in zip(weights, biases))
    return ((a + b) + (b + c)) + d + e


if __name__ == "__main__":
    key = jax.random.PRNGKey(0)
    keys = jax.random.split(key, 13)

    # Deterministic parameter init (mimics nn.Linear's uniform(-1/sqrt(fan_in), ...)).
    bound = 1.0 / jnp.sqrt(jnp.float32(FEAT))
    weights = [
        jax.random.uniform(keys[1 + i], (FEAT, FEAT), jnp.float32, -bound, bound)
        for i in range(5)
    ]
    biases = [
        jax.random.uniform(keys[6 + i], (1, FEAT), jnp.float32, -bound, bound)
        for i in range(5)
    ]

    # 1) Tiny batch (the module's natural test size) -> fast XLA bypass path.
    x_small = jax.random.normal(keys[0], (8, FEAT), dtype=jnp.float32)
    out_small = jax.block_until_ready(my_module_forward(x_small, weights, biases))
    assert out_small.shape == (8, FEAT)
    assert jnp.allclose(out_small, _reference(x_small, weights, biases), atol=1e-5, rtol=1e-5)

    # 2) Small batch, Pallas path forced (exercises the lane-packed kernel; B % 64 == 0).
    x_256 = jax.random.normal(keys[11], (256, FEAT), dtype=jnp.float32)
    out_256 = jax.block_until_ready(
        my_module_forward(x_256, weights, biases, force_pallas=True))
    assert out_256.shape == (256, FEAT)
    assert jnp.allclose(out_256, _reference(x_256, weights, biases), atol=1e-5, rtol=1e-5)

    # 3) Ragged batch, Pallas path forced (exercises the pad / tail-slice handling).
    x_200 = jax.random.normal(keys[12], (200, FEAT), dtype=jnp.float32)
    out_200 = jax.block_until_ready(
        my_module_forward(x_200, weights, biases, force_pallas=True))
    assert out_200.shape == (200, FEAT)
    assert jnp.allclose(out_200, _reference(x_200, weights, biases), atol=1e-5, rtol=1e-5)

    print("KERNEL_OK")
</pallas_src>

<mosaic_0001>
module attributes {stable_mosaic.version = 11 : i64} {
  func.func @_packed_linear_kernel(%arg0: i32, %arg1: memref<4x640xf32, #tpu.memory_space<vmem>>, %arg2: memref<640x640xf32, #tpu.memory_space<vmem>>, %arg3: memref<1x640xf32, #tpu.memory_space<vmem>>, %arg4: memref<4x640xf32, #tpu.memory_space<vmem>>) attributes {dimension_semantics = [#tpu.dimension_semantics<parallel>], iteration_bounds = array<i64: 1>, scalar_prefetch = 0 : i64, scratch_operands = 0 : i64, tpu.core_type = #tpu.core_type<tc>, window_params = [{transform_indices = @transform_0, window_bounds = array<i64: 4, 640>}, {pipeline_mode = #tpu.pipeline_mode<synchronous>, transform_indices = @transform_1, window_bounds = array<i64: 640, 640>}, {pipeline_mode = #tpu.pipeline_mode<synchronous>, transform_indices = @transform_2, window_bounds = array<i64: 1, 640>}, {transform_indices = @transform_3, window_bounds = array<i64: 4, 640>}]} {
    %c0 = arith.constant 0 : index
    %c0_0 = arith.constant 0 : index
    %0 = vector.load %arg1[%c0, %c0_0] : memref<4x640xf32, #tpu.memory_space<vmem>>, vector<4x640xf32>
    %c0_1 = arith.constant 0 : index
    %c0_2 = arith.constant 0 : index
    %1 = vector.load %arg2[%c0_1, %c0_2] : memref<640x640xf32, #tpu.memory_space<vmem>>, vector<640x640xf32>
    %cst = arith.constant dense<0.000000e+00> : vector<4x640xf32>
    %2 = tpu.matmul %0, %1, %cst {dimension_numbers = #tpu.dot_dimension_numbers<[1], [0], [0], [1], [0, 0, 1, 1], [], []>} : vector<4x640xf32>, vector<640x640xf32>, vector<4x640xf32> -> vector<4x640xf32>
    %c0_3 = arith.constant 0 : index
    %c0_4 = arith.constant 0 : index
    %3 = vector.load %arg3[%c0_3, %c0_4] : memref<1x640xf32, #tpu.memory_space<vmem>>, vector<1x640xf32>
    %4 = vector.broadcast %3 : vector<1x640xf32> to vector<4x640xf32>
    %5 = arith.addf %2, %4 : vector<4x640xf32>
    %c0_5 = arith.constant 0 : index
    %c0_6 = arith.constant 0 : index
    %6 = vector.load %arg4[%c0_5, %c0_6] : memref<4x640xf32, #tpu.memory_space<vmem>>, vector<4x640xf32>
    tpu.vector_store %arg4[%c0_5, %c0_6], %5 {strides = array<i32>} : memref<4x640xf32, #tpu.memory_space<vmem>>, vector<4x640xf32>,
    return
  }
  func.func @transform_0(%arg0: i32) -> (i32, i32) {
    %c0_i32 = arith.constant 0 : i32
    %c0_i32_0 = arith.constant 0 : i32
    return %arg0, %c0_i32 : i32, i32
  }
  func.func @transform_1(%arg0: i32) -> (i32, i32) {
    %c0_i32 = arith.constant 0 : i32
    %c0_i32_0 = arith.constant 0 : i32
    %c0_i32_1 = arith.constant 0 : i32
    return %c0_i32, %c0_i32_0 : i32, i32
  }
  func.func @transform_2(%arg0: i32) -> (i32, i32) {
    %c0_i32 = arith.constant 0 : i32
    %c0_i32_0 = arith.constant 0 : i32
    %c0_i32_1 = arith.constant 0 : i32
    return %c0_i32, %c0_i32_0 : i32, i32
  }
  func.func @transform_3(%arg0: i32) -> (i32, i32) {
    %c0_i32 = arith.constant 0 : i32
    %c0_i32_0 = arith.constant 0 : i32
    return %arg0, %c0_i32 : i32, i32
  }
}

</mosaic_0001>

<llo_original>
// kernel: tpu_custom_call.1
$region0: #{tpu_custom_call.1}
  #allocation0 [shape = 'u32[]', space=smem, size = 0x4, offset = 0x4, fixed_abs, tag = 'smem constant byte address 0x4 - core index']
  #allocation1 [shape = 'u32[144,128]{1,0:T(1,128)}', space=vmem, size = 0x12000, scoped, tag = 'internal scratch']
  %s0 = inlined_call_operand.hbm [shape: f32[4,640], index: 0, kind: input, shape index: {}]
  %s1 = inlined_call_operand.hbm [shape: f32[640,640], index: 1, kind: input, shape index: {}]
  %s2 = inlined_call_operand.hbm [shape: f32[1,640], index: 2, kind: input, shape index: {}]
  %s3 = inlined_call_operand.hbm [shape: f32[4,640], index: 3, kind: output, shape index: {}]
  %s4 = sld [smem:[#allocation0]]
  $region34: #{tpu_custom_call.1} parent=0
    _
  %s6 = ssub.s32 1, %s4
  %s7 = scalar_select 0, %s6, %s4
  $region1: #{tpu_custom_call.1} parent=0
    #allocation2 [shape = 'u8[10240]{0}', space=vmem, size = 0x2800, scoped, tag = 'input window, operand 0, single buffered']
    #allocation3 [shape = 's32[1]{0}', space=sflag, size = 0x4, scoped, tag = 'scoped memory for tpu_custom_call.1']
    #allocation4 [shape = 's32[1]{0}', space=sflag, size = 0x4, scoped, tag = 'scoped memory for tpu_custom_call.1']
    #allocation5 [shape = 'u8[1638400]{0}', space=vmem, size = 0x190000, scoped, tag = 'input window, operand 1, single buffered']
    #allocation6 [shape = 's32[1]{0}', space=sflag, size = 0x4, scoped, tag = 'scoped memory for tpu_custom_call.1']
    #allocation7 [shape = 'u8[2560]{0}', space=vmem, size = 0xc00, scoped, tag = 'input window, operand 2, single buffered']
    #allocation8 [shape = 'u8[10240]{0}', space=vmem, size = 0x2800, scoped, tag = 'output window, operand 0, single buffered']
    %8 = vsyncpa [#allocation3], 0
    %9 = vsyncpa [#allocation6], 0
    %10 = vsyncpa [#allocation4], 0
    // Predicated region
    $region2: #{tpu_custom_call.1} parent=1 // pred_check
      _
    $region3: #{tpu_custom_call.1} parent=1 // pred_check_branch
      %12 = sbr.rel (0) target = $region5
    $region4: #{tpu_custom_call.1} parent=1 // pred_region
      %s14 = ssub.s32 320, 320
      %15 = vsyncadd [#allocation3], %s14
      %s17 = sshll.u32 [#allocation2], 4
      %s18 = int_to_ptr.vmem [resolvable:$true] %s17
      %20 = dma.hbm_to_vmem [thread:$0]  %s0, 320, %s18, [#allocation3]
    $region5: #{tpu_custom_call.1} parent=1 // pred_fallthru
      _
    // Predicated region
    $region6: #{tpu_custom_call.1} parent=1 // pred_check
      _
    $region7: #{tpu_custom_call.1} parent=1 // pred_check_branch
      %22 = sbr.rel (0) target = $region9
    $region8: #{tpu_custom_call.1} parent=1 // pred_region
      %s24 = ssub.s32 51200, 51200
      %25 = vsyncadd [#allocation6], %s24
      %s26 = sshll.u32 [#allocation5], 4
      %s27 = int_to_ptr.vmem [resolvable:$true] %s26
      %32 = dma.hbm_to_vmem [thread:$0]  %s1, 51200, %s27, [#allocation6], 640, 640, 40
    $region9: #{tpu_custom_call.1} parent=1 // pred_fallthru
      _
    // Predicated region
    $region10: #{tpu_custom_call.1} parent=1 // pred_check
      _
    $region11: #{tpu_custom_call.1} parent=1 // pred_check_branch
      %34 = sbr.rel (0) target = $region13
    $region12: #{tpu_custom_call.1} parent=1 // pred_region
      %s36 = ssub.s32 80, 80
      %37 = vsyncadd [#allocation6], %s36
      %s39 = sshll.u32 [#allocation7], 4
      %s40 = int_to_ptr.vmem [resolvable:$true] %s39
      %42 = dma.hbm_to_vmem [thread:$0]  %s2, 80, %s40, [#allocation6]
    $region13: #{tpu_custom_call.1} parent=1 // pred_fallthru
      _
    // Predicated region
    $region14: #{tpu_custom_call.1} parent=1 // pred_check
      _
    $region15: #{tpu_custom_call.1} parent=1 // pred_check_branch
      %44 = sbr.rel (0) target = $region17
    $region16: #{tpu_custom_call.1} parent=1 // pred_region
      %45 = dma.done [#allocation3], 320
    $region17: #{tpu_custom_call.1} parent=1 // pred_fallthru
      _
    // Predicated region
    $region18: #{tpu_custom_call.1} parent=1 // pred_check
      _
    $region19: #{tpu_custom_call.1} parent=1 // pred_check_branch
      %47 = sbr.rel (0) target = $region21
    $region20: #{tpu_custom_call.1} parent=1 // pred_region
      %48 = dma.done [#allocation6], 51200
    $region21: #{tpu_custom_call.1} parent=1 // pred_fallthru
      _
    // Predicated region
    $region22: #{tpu_custom_call.1} parent=1 // pred_check
      _
    $region23: #{tpu_custom_call.1} parent=1 // pred_check_branch
      %50 = sbr.rel (0) target = $region25
    $region24: #{tpu_custom_call.1} parent=1 // pred_region
      %51 = dma.done [#allocation6], 80
    $region25: #{tpu_custom_call.1} parent=1 // pred_fallthru
      _
    %v52 = vld [vmem:[#allocation2] sm:$0xff]
    %v53 = vld [vmem:[#allocation2 + $0x8] sm:$0xff]
    %v54 = vld [vmem:[#allocation2 + $0x10] sm:$0xf]
    %v55 = vld [vmem:[#allocation5] sm:$0xff]
    %v56 = vld [vmem:[#allocation5 + $0x8] sm:$0xff]
    %v57 = vld [vmem:[#allocation5 + $0x10] sm:$0xff]
    %v58 = vld [vmem:[#allocation5 + $0x18] sm:$0xff]
    %v59 = vld [vmem:[#allocation5 + $0x20] sm:$0xff]
    %v60 = vld [vmem:[#allocation5 + $0x28] sm:$0xff]
    %v61 = vld [vmem:[#allocation5 + $0x30] sm:$0xff]
    %v62 = vld [vmem:[#allocation5 + $0x38] sm:$0xff]
    %v63 = vld [vmem:[#allocation5 + $0x40] sm:$0xff]
    %v64 = vld [vmem:[#allocation5 + $0x48] sm:$0xff]
    %v65 = vld [vmem:[#allocation5 + $0x50] sm:$0xff]
    %v66 = vld [vmem:[#allocation5 + $0x58] sm:$0xff]
    %v67 = vld [vmem:[#allocation5 + $0x60] sm:$0xff]
    %v68 = vld [vmem:[#allocation5 + $0x68] sm:$0xff]
    %v69 = vld [vmem:[#allocation5 + $0x70] sm:$0xff]
    %v70 = vld [vmem:[#allocation5 + $0x78] sm:$0xff]
    %v71 = vld [vmem:[#allocation5 + $0x80] sm:$0xff]
    %v72 = vld [vmem:[#allocation5 + $0x88] sm:$0xff]
    %v73 = vld [vmem:[#allocation5 + $0x90] sm:$0xff]
    %v74 = vld [vmem:[#allocation5 + $0x98] sm:$0xff]
    %v75 = vld [vmem:[#allocation5 + $0xa0] sm:$0xff]
    %v76 = vld [vmem:[#allocation5 + $0xa8] sm:$0xff]
    %v77 = vld [vmem:[#allocation5 + $0xb0] sm:$0xff]
    %v78 = vld [vmem:[#allocation5 + $0xb8] sm:$0xff]
    %v79 = vld [vmem:[#allocation5 + $0xc0] sm:$0xff]
    %v80 = vld [vmem:[#allocation5 + $0xc8] sm:$0xff]
    %v81 = vld [vmem:[#allocation5 + $0xd0] sm:$0xff]
    %v82 = vld [vmem:[#allocation5 + $0xd8] sm:$0xff]
    %v83 = vld [vmem:[#allocation5 + $0xe0] sm:$0xff]
    %v84 = vld [vmem:[#allocation5 + $0xe8] sm:$0xff]
    %v85 = vld [vmem:[#allocation5 + $0xf0] sm:$0xff]
    %v86 = vld [vmem:[#allocation5 + $0xf8] sm:$0xff]
    %v87 = vld [vmem:[#allocation5 + $0x100] sm:$0xff]
    %v88 = vld [vmem:[#allocation5 + $0x108] sm:$0xff]
    %v89 = vld [vmem:[#allocation5 + $0x110] sm:$0xff]
    %v90 = vld [vmem:[#allocation5 + $0x118] sm:$0xff]
    %v91 = vld [vmem:[#allocation5 + $0x120] sm:$0xff]
    %v92 = vld [vmem:[#allocation5 + $0x128] sm:$0xff]
    %v93 = vld [vmem:[#allocation5 + $0x130] sm:$0xff]
    %v94 = vld [vmem:[#allocation5 + $0x138] sm:$0xff]
    %v95 = vld [vmem:[#allocation5 + $0x140] sm:$0xff]
    %v96 = vld [vmem:[#allocation5 + $0x148] sm:$0xff]
    %v97 = vld [vmem:[#allocation5 + $0x150] sm:$0xff]
    %v98 = vld [vmem:[#allocation5 + $0x158] sm:$0xff]
    %v99 = vld [vmem:[#allocation5 + $0x160] sm:$0xff]
    %v100 = vld [vmem:[#allocation5 + $0x168] sm:$0xff]
    %v101 = vld [vmem:[#allocation5 + $0x170] sm:$0xff]
    %v102 = vld [vmem:[#allocation5 + $0x178] sm:$0xff]
    %v103 = vld [vmem:[#allocation5 + $0x180] sm:$0xff]
    %v104 = vld [vmem:[#allocation5 + $0x188] sm:$0xff]
    %v105 = vld [vmem:[#allocation5 + $0x190] sm:$0xff]
    %v106 = vld [vmem:[#allocation5 + $0x198] sm:$0xff]
    %v107 = vld [vmem:[#allocation5 + $0x1a0] sm:$0xff]
    %v108 = vld [vmem:[#allocation5 + $0x1a8] sm:$0xff]
    %v109 = vld [vmem:[#allocation5 + $0x1b0] sm:$0xff]
    %v110 = vld [vmem:[#allocation5 + $0x1b8] sm:$0xff]
    %v111 = vld [vmem:[#allocation5 + $0x1c0] sm:$0xff]
    %v112 = vld [vmem:[#allocation5 + $0x1c8] sm:$0xff]
    %v113 = vld [vmem:[#allocation5 + $0x1d0] sm:$0xff]
    %v114 = vld [vmem:[#allocation5 + $0x1d8] sm:$0xff]
    %v115 = vld [vmem:[#allocation5 + $0x1e0] sm:$0xff]
    %v116 = vld [vmem:[#allocation5 + $0x1e8] sm:$0xff]
    %v117 = vld [vmem:[#allocation5 + $0x1f0] sm:$0xff]
    %v118 = vld [vmem:[#allocation5 + $0x1f8] sm:$0xff]
    %v119 = vld [vmem:[#allocation5 + $0x200] sm:$0xff]
    %v120 = vld [vmem:[#allocation5 + $0x208] sm:$0xff]
    %v121 = vld [vmem:[#allocation5 + $0x210] sm:$0xff]
    %v122 = vld [vmem:[#allocation5 + $0x218] sm:$0xff]
    %v123 = vld [vmem:[#allocation5 + $0x220] sm:$0xff]
    %v124 = vld [vmem:[#allocation5 + $0x228] sm:$0xff]
    %v125 = vld [vmem:[#allocation5 + $0x230] sm:$0xff]
    %v126 = vld [vmem:[#allocation5 + $0x238] sm:$0xff]
    %v127 = vld [vmem:[#allocation5 + $0x240] sm:$0xff]
    %v128 = vld [vmem:[#allocation5 + $0x248] sm:$0xff]
    %v129 = vld [vmem:[#allocation5 + $0x250] sm:$0xff]
    %v130 = vld [vmem:[#allocation5 + $0x258] sm:$0xff]
    %v131 = vld [vmem:[#allocation5 + $0x260] sm:$0xff]
    %v132 = vld [vmem:[#allocation5 + $0x268] sm:$0xff]
    %v133 = vld [vmem:[#allocation5 + $0x270] sm:$0xff]
    %v134 = vld [vmem:[#allocation5 + $0x278] sm:$0xff]
    %v135 = vld [vmem:[#allocation5 + $0x280] sm:$0xff]
    %v136 = vld [vmem:[#allocation5 + $0x288] sm:$0xff]
    %v137 = vld [vmem:[#allocation5 + $0x290] sm:$0xff]
    %v138 = vld [vmem:[#allocation5 + $0x298] sm:$0xff]
    %v139 = vld [vmem:[#allocation5 + $0x2a0] sm:$0xff]
    %v140 = vld [vmem:[#allocation5 + $0x2a8] sm:$0xff]
    %v141 = vld [vmem:[#allocation5 + $0x2b0] sm:$0xff]
    %v142 = vld [vmem:[#allocation5 + $0x2b8] sm:$0xff]
    %v143 = vld [vmem:[#allocation5 + $0x2c0] sm:$0xff]
    %v144 = vld [vmem:[#allocation5 + $0x2c8] sm:$0xff]
    %v145 = vld [vmem:[#allocation5 + $0x2d0] sm:$0xff]
    %v146 = vld [vmem:[#allocation5 + $0x2d8] sm:$0xff]
    %v147 = vld [vmem:[#allocation5 + $0x2e0] sm:$0xff]
    %v148 = vld [vmem:[#allocation5 + $0x2e8] sm:$0xff]
    %v149 = vld [vmem:[#allocation5 + $0x2f0] sm:$0xff]
    %v150 = vld [vmem:[#allocation5 + $0x2f8] sm:$0xff]
    %v151 = vld [vmem:[#allocation5 + $0x300] sm:$0xff]
    %v152 = vld [vmem:[#allocation5 + $0x308] sm:$0xff]
    %v153 = vld [vmem:[#allocation5 + $0x310] sm:$0xff]
    %v154 = vld [vmem:[#allocation5 + $0x318] sm:$0xff]
    %v155 = vld [vmem:[#allocation5 + $0x320] sm:$0xff]
    %v156 = vld [vmem:[#allocation5 + $0x328] sm:$0xff]
    %v157 = vld [vmem:[#allocation5 + $0x330] sm:$0xff]
    %v158 = vld [vmem:[#allocation5 + $0x338] sm:$0xff]
    %v159 = vld [vmem:[#allocation5 + $0x340] sm:$0xff]
    %v160 = vld [vmem:[#allocation5 + $0x348] sm:$0xff]
    %v161 = vld [vmem:[#allocation5 + $0x350] sm:$0xff]
    %v162 = vld [vmem:[#allocation5 + $0x358] sm:$0xff]
    %v163 = vld [vmem:[#allocation5 + $0x360] sm:$0xff]
    %v164 = vld [vmem:[#allocation5 + $0x368] sm:$0xff]
    %v165 = vld [vmem:[#allocation5 + $0x370] sm:$0xff]
    %v166 = vld [vmem:[#allocation5 + $0x378] sm:$0xff]
    %v167 = vld [vmem:[#allocation5 + $0x380] sm:$0xff]
    %v168 = vld [vmem:[#allocation5 + $0x388] sm:$0xff]
    %v169 = vld [vmem:[#allocation5 + $0x390] sm:$0xff]
    %v170 = vld [vmem:[#allocation5 + $0x398] sm:$0xff]
    %v171 = vld [vmem:[#allocation5 + $0x3a0] sm:$0xff]
    %v172 = vld [vmem:[#allocation5 + $0x3a8] sm:$0xff]
    %v173 = vld [vmem:[#allocation5 + $0x3b0] sm:$0xff]
    %v174 = vld [vmem:[#allocation5 + $0x3b8] sm:$0xff]
    %v175 = vld [vmem:[#allocation5 + $0x3c0] sm:$0xff]
    %v176 = vld [vmem:[#allocation5 + $0x3c8] sm:$0xff]
    %v177 = vld [vmem:[#allocation5 + $0x3d0] sm:$0xff]
    %v178 = vld [vmem:[#allocation5 + $0x3d8] sm:$0xff]
    %v179 = vld [vmem:[#allocation5 + $0x3e0] sm:$0xff]
    %v180 = vld [vmem:[#allocation5 + $0x3e8] sm:$0xff]
    %v181 = vld [vmem:[#allocation5 + $0x3f0] sm:$0xff]
    %v182 = vld [vmem:[#allocation5 + $0x3f8] sm:$0xff]
    %v183 = vld [vmem:[#allocation5 + $0x400] sm:$0xff]
    %v184 = vld [vmem:[#allocation5 + $0x408] sm:$0xff]
    %v185 = vld [vmem:[#allocation5 + $0x410] sm:$0xff]
    %v186 = vld [vmem:[#allocation5 + $0x418] sm:$0xff]
    %v187 = vld [vmem:[#allocation5 + $0x420] sm:$0xff]
    %v188 = vld [vmem:[#allocation5 + $0x428] sm:$0xff]
    %v189 = vld [vmem:[#allocation5 + $0x430] sm:$0xff]
    %v190 = vld [vmem:[#allocation5 + $0x438] sm:$0xff]
    %v191 = vld [vmem:[#allocation5 + $0x440] sm:$0xff]
    %v192 = vld [vmem:[#allocation5 + $0x448] sm:$0xff]
    %v193 = vld [vmem:[#allocation5 + $0x450] sm:$0xff]
    %v194 = vld [vmem:[#allocation5 + $0x458] sm:$0xff]
    %v195 = vld [vmem:[#allocation5 + $0x460] sm:$0xff]
    %v196 = vld [vmem:[#allocation5 + $0x468] sm:$0xff]
    %v197 = vld [vmem:[#allocation5 + $0x470] sm:$0xff]
    %v198 = vld [vmem:[#allocation5 + $0x478] sm:$0xff]
    %v199 = vld [vmem:[#allocation5 + $0x480] sm:$0xff]
    %v200 = vld [vmem:[#allocation5 + $0x488] sm:$0xff]
    %v201 = vld [vmem:[#allocation5 + $0x490] sm:$0xff]
    %v202 = vld [vmem:[#allocation5 + $0x498] sm:$0xff]
    %v203 = vld [vmem:[#allocation5 + $0x4a0] sm:$0xff]
    %v204 = vld [vmem:[#allocation5 + $0x4a8] sm:$0xff]
    %v205 = vld [vmem:[#allocation5 + $0x4b0] sm:$0xff]
    %v206 = vld [vmem:[#allocation5 + $0x4b8] sm:$0xff]
    %v207 = vld [vmem:[#allocation5 + $0x4c0] sm:$0xff]
    %v208 = vld [vmem:[#allocation5 + $0x4c8] sm:$0xff]
    %v209 = vld [vmem:[#allocation5 + $0x4d0] sm:$0xff]
    %v210 = vld [vmem:[#allocation5 + $0x4d8] sm:$0xff]
    %v211 = vld [vmem:[#allocation5 + $0x4e0] sm:$0xff]
    %v212 = vld [vmem:[#allocation5 + $0x4e8] sm:$0xff]
    %v213 = vld [vmem:[#allocation5 + $0x4f0] sm:$0xff]
    %v214 = vld [vmem:[#allocation5 + $0x4f8] sm:$0xff]
    %v215 = vld [vmem:[#allocation5 + $0x500] sm:$0xff]
    %v216 = vld [vmem:[#allocation5 + $0x508] sm:$0xff]
    %v217 = vld [vmem:[#allocation5 + $0x510] sm:$0xff]
    %v218 = vld [vmem:[#allocation5 + $0x518] sm:$0xff]
    %v219 = vld [vmem:[#allocation5 + $0x520] sm:$0xff]
    %v220 = vld [vmem:[#allocation5 + $0x528] sm:$0xff]
    %v221 = vld [vmem:[#allocation5 + $0x530] sm:$0xff]
    %v222 = vld [vmem:[#allocation5 + $0x538] sm:$0xff]
    %v223 = vld [vmem:[#allocation5 + $0x540] sm:$0xff]
    %v224 = vld [vmem:[#allocation5 + $0x548] sm:$0xff]
    %v225 = vld [vmem:[#allocation5 + $0x550] sm:$0xff]
    %v226 = vld [vmem:[#allocation5 + $0x558] sm:$0xff]
    %v227 = vld [vmem:[#allocation5 + $0x560] sm:$0xff]
    %v228 = vld [vmem:[#allocation5 + $0x568] sm:$0xff]
    %v229 = vld [vmem:[#allocation5 + $0x570] sm:$0xff]
    %v230 = vld [vmem:[#allocation5 + $0x578] sm:$0xff]
    %v231 = vld [vmem:[#allocation5 + $0x580] sm:$0xff]
    %v232 = vld [vmem:[#allocation5 + $0x588] sm:$0xff]
    %v233 = vld [vmem:[#allocation5 + $0x590] sm:$0xff]
    %v234 = vld [vmem:[#allocation5 + $0x598] sm:$0xff]
    %v235 = vld [vmem:[#allocation5 + $0x5a0] sm:$0xff]
    %v236 = vld [vmem:[#allocation5 + $0x5a8] sm:$0xff]
    %v237 = vld [vmem:[#allocation5 + $0x5b0] sm:$0xff]
    %v238 = vld [vmem:[#allocation5 + $0x5b8] sm:$0xff]
    %v239 = vld [vmem:[#allocation5 + $0x5c0] sm:$0xff]
    %v240 = vld [vmem:[#allocation5 + $0x5c8] sm:$0xff]
    %v241 = vld [vmem:[#allocation5 + $0x5d0] sm:$0xff]
    %v242 = vld [vmem:[#allocation5 + $0x5d8] sm:$0xff]
    %v243 = vld [vmem:[#allocation5 + $0x5e0] sm:$0xff]
    %v244 = vld [vmem:[#allocation5 + $0x5e8] sm:$0xff]
    %v245 = vld [vmem:[#allocation5 + $0x5f0] sm:$0xff]
    %v246 = vld [vmem:[#allocation5 + $0x5f8] sm:$0xff]
    %v247 = vld [vmem:[#allocation5 + $0x600] sm:$0xff]
    %v248 = vld [vmem:[#allocation5 + $0x608] sm:$0xff]
    %v249 = vld [vmem:[#allocation5 + $0x610] sm:$0xff]
    %v250 = vld [vmem:[#allocation5 + $0x618] sm:$0xff]
    %v251 = vld [vmem:[#allocation5 + $0x620] sm:$0xff]
    %v252 = vld [vmem:[#allocation5 + $0x628] sm:$0xff]
    %v253 = vld [vmem:[#allocation5 + $0x630] sm:$0xff]
    %v254 = vld [vmem:[#allocation5 + $0x638] sm:$0xff]
    %v255 = vld [vmem:[#allocation5 + $0x640] sm:$0xff]
    %v256 = vld [vmem:[#allocation5 + $0x648] sm:$0xff]
    %v257 = vld [vmem:[#allocation5 + $0x650] sm:$0xff]
    %v258 = vld [vmem:[#allocation5 + $0x658] sm:$0xff]
    %v259 = vld [vmem:[#allocation5 + $0x660] sm:$0xff]
    %v260 = vld [vmem:[#allocation5 + $0x668] sm:$0xff]
    %v261 = vld [vmem:[#allocation5 + $0x670] sm:$0xff]
    %v262 = vld [vmem:[#allocation5 + $0x678] sm:$0xff]
    %v263 = vld [vmem:[#allocation5 + $0x680] sm:$0xff]
    %v264 = vld [vmem:[#allocation5 + $0x688] sm:$0xff]
    %v265 = vld [vmem:[#allocation5 + $0x690] sm:$0xff]
    %v266 = vld [vmem:[#allocation5 + $0x698] sm:$0xff]
    %v267 = vld [vmem:[#allocation5 + $0x6a0] sm:$0xff]
    %v268 = vld [vmem:[#allocation5 + $0x6a8] sm:$0xff]
    %v269 = vld [vmem:[#allocation5 + $0x6b0] sm:$0xff]
    %v270 = vld [vmem:[#allocation5 + $0x6b8] sm:$0xff]
    %v271 = vld [vmem:[#allocation5 + $0x6c0] sm:$0xff]
    %v272 = vld [vmem:[#allocation5 + $0x6c8] sm:$0xff]
    %v273 = vld [vmem:[#allocation5 + $0x6d0] sm:$0xff]
    %v274 = vld [vmem:[#allocation5 + $0x6d8] sm:$0xff]
    %v275 = vld [vmem:[#allocation5 + $0x6e0] sm:$0xff]
    %v276 = vld [vmem:[#allocation5 + $0x6e8] sm:$0xff]
    %v277 = vld [vmem:[#allocation5 + $0x6f0] sm:$0xff]
    %v278 = vld [vmem:[#allocation5 + $0x6f8] sm:$0xff]
    %v279 = vld [vmem:[#allocation5 + $0x700] sm:$0xff]
    %v280 = vld [vmem:[#allocation5 + $0x708] sm:$0xff]
    %v281 = vld [vmem:[#allocation5 + $0x710] sm:$0xff]
    %v282 = vld [vmem:[#allocation5 + $0x718] sm:$0xff]
    %v283 = vld [vmem:[#allocation5 + $0x720] sm:$0xff]
    %v284 = vld [vmem:[#allocation5 + $0x728] sm:$0xff]
    %v285 = vld [vmem:[#allocation5 + $0x730] sm:$0xff]
    %v286 = vld [vmem:[#allocation5 + $0x738] sm:$0xff]
    %v287 = vld [vmem:[#allocation5 + $0x740] sm:$0xff]
    %v288 = vld [vmem:[#allocation5 + $0x748] sm:$0xff]
    %v289 = vld [vmem:[#allocation5 + $0x750] sm:$0xff]
    %v290 = vld [vmem:[#allocation5 + $0x758] sm:$0xff]
    %v291 = vld [vmem:[#allocation5 + $0x760] sm:$0xff]
    %v292 = vld [vmem:[#allocation5 + $0x768] sm:$0xff]
    %v293 = vld [vmem:[#allocation5 + $0x770] sm:$0xff]
    %v294 = vld [vmem:[#allocation5 + $0x778] sm:$0xff]
    %v295 = vld [vmem:[#allocation5 + $0x780] sm:$0xff]
    %v296 = vld [vmem:[#allocation5 + $0x788] sm:$0xff]
    %v297 = vld [vmem:[#allocation5 + $0x790] sm:$0xff]
    %v298 = vld [vmem:[#allocation5 + $0x798] sm:$0xff]
    %v299 = vld [vmem:[#allocation5 + $0x7a0] sm:$0xff]
    %v300 = vld [vmem:[#allocation5 + $0x7a8] sm:$0xff]
    %v301 = vld [vmem:[#allocation5 + $0x7b0] sm:$0xff]
    %v302 = vld [vmem:[#allocation5 + $0x7b8] sm:$0xff]
    %v303 = vld [vmem:[#allocation5 + $0x7c0] sm:$0xff]
    %v304 = vld [vmem:[#allocation5 + $0x7c8] sm:$0xff]
    %v305 = vld [vmem:[#allocation5 + $0x7d0] sm:$0xff]
    %v306 = vld [vmem:[#allocation5 + $0x7d8] sm:$0xff]
    %v307 = vld [vmem:[#allocation5 + $0x7e0] sm:$0xff]
    %v308 = vld [vmem:[#allocation5 + $0x7e8] sm:$0xff]
    %v309 = vld [vmem:[#allocation5 + $0x7f0] sm:$0xff]
    %v310 = vld [vmem:[#allocation5 + $0x7f8] sm:$0xff]
    %v311 = vld [vmem:[#allocation5 + $0x800] sm:$0xff]
    %v312 = vld [vmem:[#allocation5 + $0x808] sm:$0xff]
    %v313 = vld [vmem:[#allocation5 + $0x810] sm:$0xff]
    %v314 = vld [vmem:[#allocation5 + $0x818] sm:$0xff]
    %v315 = vld [vmem:[#allocation5 + $0x820] sm:$0xff]
    %v316 = vld [vmem:[#allocation5 + $0x828] sm:$0xff]
    %v317 = vld [vmem:[#allocation5 + $0x830] sm:$0xff]
    %v318 = vld [vmem:[#allocation5 + $0x838] sm:$0xff]
    %v319 = vld [vmem:[#allocation5 + $0x840] sm:$0xff]
    %v320 = vld [vmem:[#allocation5 + $0x848] sm:$0xff]
    %v321 = vld [vmem:[#allocation5 + $0x850] sm:$0xff]
    %v322 = vld [vmem:[#allocation5 + $0x858] sm:$0xff]
    %v323 = vld [vmem:[#allocation5 + $0x860] sm:$0xff]
    %v324 = vld [vmem:[#allocation5 + $0x868] sm:$0xff]
    %v325 = vld [vmem:[#allocation5 + $0x870] sm:$0xff]
    %v326 = vld [vmem:[#allocation5 + $0x878] sm:$0xff]
    %v327 = vld [vmem:[#allocation5 + $0x880] sm:$0xff]
    %v328 = vld [vmem:[#allocation5 + $0x888] sm:$0xff]
    %v329 = vld [vmem:[#allocation5 + $0x890] sm:$0xff]
    %v330 = vld [vmem:[#allocation5 + $0x898] sm:$0xff]
    %v331 = vld [vmem:[#allocation5 + $0x8a0] sm:$0xff]
    %v332 = vld [vmem:[#allocation5 + $0x8a8] sm:$0xff]
    %v333 = vld [vmem:[#allocation5 + $0x8b0] sm:$0xff]
    %v334 = vld [vmem:[#allocation5 + $0x8b8] sm:$0xff]
    %v335 = vld [vmem:[#allocation5 + $0x8c0] sm:$0xff]
    %v336 = vld [vmem:[#allocation5 + $0x8c8] sm:$0xff]
    %v337 = vld [vmem:[#allocation5 + $0x8d0] sm:$0xff]
    %v338 = vld [vmem:[#allocation5 + $0x8d8] sm:$0xff]
    %v339 = vld [vmem:[#allocation5 + $0x8e0] sm:$0xff]
    %v340 = vld [vmem:[#allocation5 + $0x8e8] sm:$0xff]
    %v341 = vld [vmem:[#allocation5 + $0x8f0] sm:$0xff]
    %v342 = vld [vmem:[#allocation5 + $0x8f8] sm:$0xff]
    %v343 = vld [vmem:[#allocation5 + $0x900] sm:$0xff]
    %v344 = vld [vmem:[#allocation5 + $0x908] sm:$0xff]
    %v345 = vld [vmem:[#allocation5 + $0x910] sm:$0xff]
    %v346 = vld [vmem:[#allocation5 + $0x918] sm:$0xff]
    %v347 = vld [vmem:[#allocation5 + $0x920] sm:$0xff]
    %v348 = vld [vmem:[#allocation5 + $0x928] sm:$0xff]
    %v349 = vld [vmem:[#allocation5 + $0x930] sm:$0xff]
    %v350 = vld [vmem:[#allocation5 + $0x938] sm:$0xff]
    %v351 = vld [vmem:[#allocation5 + $0x940] sm:$0xff]
    %v352 = vld [vmem:[#allocation5 + $0x948] sm:$0xff]
    %v353 = vld [vmem:[#allocation5 + $0x950] sm:$0xff]
    %v354 = vld [vmem:[#allocation5 + $0x958] sm:$0xff]
    %v355 = vld [vmem:[#allocation5 + $0x960] sm:$0xff]
    %v356 = vld [vmem:[#allocation5 + $0x968] sm:$0xff]
    %v357 = vld [vmem:[#allocation5 + $0x970] sm:$0xff]
    %v358 = vld [vmem:[#allocation5 + $0x978] sm:$0xff]
    %v359 = vld [vmem:[#allocation5 + $0x980] sm:$0xff]
    %v360 = vld [vmem:[#allocation5 + $0x988] sm:$0xff]
    %v361 = vld [vmem:[#allocation5 + $0x990] sm:$0xff]
    %v362 = vld [vmem:[#allocation5 + $0x998] sm:$0xff]
    %v363 = vld [vmem:[#allocation5 + $0x9a0] sm:$0xff]
    %v364 = vld [vmem:[#allocation5 + $0x9a8] sm:$0xff]
    %v365 = vld [vmem:[#allocation5 + $0x9b0] sm:$0xff]
    %v366 = vld [vmem:[#allocation5 + $0x9b8] sm:$0xff]
    %v367 = vld [vmem:[#allocation5 + $0x9c0] sm:$0xff]
    %v368 = vld [vmem:[#allocation5 + $0x9c8] sm:$0xff]
    %v369 = vld [vmem:[#allocation5 + $0x9d0] sm:$0xff]
    %v370 = vld [vmem:[#allocation5 + $0x9d8] sm:$0xff]
    %v371 = vld [vmem:[#allocation5 + $0x9e0] sm:$0xff]
    %v372 = vld [vmem:[#allocation5 + $0x9e8] sm:$0xff]
    %v373 = vld [vmem:[#allocation5 + $0x9f0] sm:$0xff]
    %v374 = vld [vmem:[#allocation5 + $0x9f8] sm:$0xff]
    %v375 = vld [vmem:[#allocation5 + $0xa00] sm:$0xff]
    %v376 = vld [vmem:[#allocation5 + $0xa08] sm:$0xff]
    %v377 = vld [vmem:[#allocation5 + $0xa10] sm:$0xff]
    %v378 = vld [vmem:[#allocation5 + $0xa18] sm:$0xff]
    %v379 = vld [vmem:[#allocation5 + $0xa20] sm:$0xff]
    %v380 = vld [vmem:[#allocation5 + $0xa28] sm:$0xff]
    %v381 = vld [vmem:[#allocation5 + $0xa30] sm:$0xff]
    %v382 = vld [vmem:[#allocation5 + $0xa38] sm:$0xff]
    %v383 = vld [vmem:[#allocation5 + $0xa40] sm:$0xff]
    %v384 = vld [vmem:[#allocation5 + $0xa48] sm:$0xff]
    %v385 = vld [vmem:[#allocation5 + $0xa50] sm:$0xff]
    %v386 = vld [vmem:[#allocation5 + $0xa58] sm:$0xff]
    %v387 = vld [vmem:[#allocation5 + $0xa60] sm:$0xff]
    %v388 = vld [vmem:[#allocation5 + $0xa68] sm:$0xff]
    %v389 = vld [vmem:[#allocation5 + $0xa70] sm:$0xff]
    %v390 = vld [vmem:[#allocation5 + $0xa78] sm:$0xff]
    %v391 = vld [vmem:[#allocation5 + $0xa80] sm:$0xff]
    %v392 = vld [vmem:[#allocation5 + $0xa88] sm:$0xff]
    %v393 = vld [vmem:[#allocation5 + $0xa90] sm:$0xff]
    %v394 = vld [vmem:[#allocation5 + $0xa98] sm:$0xff]
    %v395 = vld [vmem:[#allocation5 + $0xaa0] sm:$0xff]
    %v396 = vld [vmem:[#allocation5 + $0xaa8] sm:$0xff]
    %v397 = vld [vmem:[#allocation5 + $0xab0] sm:$0xff]
    %v398 = vld [vmem:[#allocation5 + $0xab8] sm:$0xff]
    %v399 = vld [vmem:[#allocation5 + $0xac0] sm:$0xff]
    %v400 = vld [vmem:[#allocation5 + $0xac8] sm:$0xff]
    %v401 = vld [vmem:[#allocation5 + $0xad0] sm:$0xff]
    %v402 = vld [vmem:[#allocation5 + $0xad8] sm:$0xff]
    %v403 = vld [vmem:[#allocation5 + $0xae0] sm:$0xff]
    %v404 = vld [vmem:[#allocation5 + $0xae8] sm:$0xff]
    %v405 = vld [vmem:[#allocation5 + $0xaf0] sm:$0xff]
    %v406 = vld [vmem:[#allocation5 + $0xaf8] sm:$0xff]
    %v407 = vld [vmem:[#allocation5 + $0xb00] sm:$0xff]
    %v408 = vld [vmem:[#allocation5 + $0xb08] sm:$0xff]
    %v409 = vld [vmem:[#allocation5 + $0xb10] sm:$0xff]
    %v410 = vld [vmem:[#allocation5 + $0xb18] sm:$0xff]
    %v411 = vld [vmem:[#allocation5 + $0xb20] sm:$0xff]
    %v412 = vld [vmem:[#allocation5 + $0xb28] sm:$0xff]
    %v413 = vld [vmem:[#allocation5 + $0xb30] sm:$0xff]
    %v414 = vld [vmem:[#allocation5 + $0xb38] sm:$0xff]
    %v415 = vld [vmem:[#allocation5 + $0xb40] sm:$0xff]
    %v416 = vld [vmem:[#allocation5 + $0xb48] sm:$0xff]
    %v417 = vld [vmem:[#allocation5 + $0xb50] sm:$0xff]
    %v418 = vld [vmem:[#allocation5 + $0xb58] sm:$0xff]
    %v419 = vld [vmem:[#allocation5 + $0xb60] sm:$0xff]
    %v420 = vld [vmem:[#allocation5 + $0xb68] sm:$0xff]
    %v421 = vld [vmem:[#allocation5 + $0xb70] sm:$0xff]
    %v422 = vld [vmem:[#allocation5 + $0xb78] sm:$0xff]
    %v423 = vld [vmem:[#allocation5 + $0xb80] sm:$0xff]
    %v424 = vld [vmem:[#allocation5 + $0xb88] sm:$0xff]
    %v425 = vld [vmem:[#allocation5 + $0xb90] sm:$0xff]
    %v426 = vld [vmem:[#allocation5 + $0xb98] sm:$0xff]
    %v427 = vld [vmem:[#allocation5 + $0xba0] sm:$0xff]
    %v428 = vld [vmem:[#allocation5 + $0xba8] sm:$0xff]
    %v429 = vld [vmem:[#allocation5 + $0xbb0] sm:$0xff]
    %v430 = vld [vmem:[#allocation5 + $0xbb8] sm:$0xff]
    %v431 = vld [vmem:[#allocation5 + $0xbc0] sm:$0xff]
    %v432 = vld [vmem:[#allocation5 + $0xbc8] sm:$0xff]
    %v433 = vld [vmem:[#allocation5 + $0xbd0] sm:$0xff]
    %v434 = vld [vmem:[#allocation5 + $0xbd8] sm:$0xff]
    %v435 = vld [vmem:[#allocation5 + $0xbe0] sm:$0xff]
    %v436 = vld [vmem:[#allocation5 + $0xbe8] sm:$0xff]
    %v437 = vld [vmem:[#allocation5 + $0xbf0] sm:$0xff]
    %v438 = vld [vmem:[#allocation5 + $0xbf8] sm:$0xff]
    %v439 = vld [vmem:[#allocation5 + $0xc00] sm:$0xff]
    %v440 = vld [vmem:[#allocation5 + $0xc08] sm:$0xff]
    %v441 = vld [vmem:[#allocation5 + $0xc10] sm:$0xff]
    %v442 = vld [vmem:[#allocation5 + $0xc18] sm:$0xff]
    %v443 = vld [vmem:[#allocation5 + $0xc20] sm:$0xff]
    %v444 = vld [vmem:[#allocation5 + $0xc28] sm:$0xff]
    %v445 = vld [vmem:[#allocation5 + $0xc30] sm:$0xff]
    %v446 = vld [vmem:[#allocation5 + $0xc38] sm:$0xff]
    %v447 = vld [vmem:[#allocation5 + $0xc40] sm:$0xff]
    %v448 = vld [vmem:[#allocation5 + $0xc48] sm:$0xff]
    %v449 = vld [vmem:[#allocation5 + $0xc50] sm:$0xff]
    %v450 = vld [vmem:[#allocation5 + $0xc58] sm:$0xff]
    %v451 = vld [vmem:[#allocation5 + $0xc60] sm:$0xff]
    %v452 = vld [vmem:[#allocation5 + $0xc68] sm:$0xff]
    %v453 = vld [vmem:[#allocation5 + $0xc70] sm:$0xff]
    %v454 = vld [vmem:[#allocation5 + $0xc78] sm:$0xff]
    %v455 = vld [vmem:[#allocation7] sm:$0x1f]
    %v457 = vlaneseq
    %v458 = vshrl.u32 %v457, 7
    %v459 = vsub.s32 0, %v458
    %v460 = vrot.slane %v455, %v459
    %v461 = vlaneseq
    %v462 = vshrl.u32 %v461, 7
    %v463 = vsub.s32 1, %v462
    %v464 = vrot.slane %v455, %v463
    %v465 = vlaneseq
    %v466 = vshrl.u32 %v465, 7
    %v467 = vsub.s32 2, %v466
    %v468 = vrot.slane %v455, %v467
    %v469 = vlaneseq
    %v470 = vshrl.u32 %v469, 7
    %v471 = vsub.s32 3, %v470
    %v472 = vrot.slane %v455, %v471
    %v473 = vlaneseq
    %v474 = vshrl.u32 %v473, 7
    %v475 = vsub.s32 4, %v474
    %v476 = vrot.slane %v455, %v475
    %v484 = vcombine.high %v52, %v52
    %v485 = vcombine.high %v53, %v53
    %488 = vmatprep.subr.mxu0 %v56
    %489 = vmatpush1.msra.mxu0 %v55
    %490 = vmatprep.subr.mxu0 %v61
    %491 = vmatpush1.msra.mxu0 %v60
    %492 = vmatprep.subr.mxu0 %v66
    %493 = vmatpush1.msra.mxu0 %v65
    %494 = vmatprep.subr.mxu0 %v71
    %495 = vmatpush1.msra.mxu0 %v70
    %496 = vmatprep.subr.mxu0 %v76
    %497 = vmatpush1.msra.mxu0 %v75
    %498 = vmatprep.subr.mxu0 %v81
    %499 = vmatpush1.msra.mxu0 %v80
    %500 = vmatprep.subr.mxu0 %v86
    %501 = vmatpush1.msra.mxu0 %v85
    %502 = vmatprep.subr.mxu0 %v91
    %503 = vmatpush1.msra.mxu0 %v90
    %504 = vmatprep.subr.mxu0 %v96
    %505 = vmatpush1.msra.mxu0 %v95
    %506 = vmatprep.subr.mxu0 %v101
    %507 = vmatpush1.msra.mxu0 %v100
    %508 = vmatprep.subr.mxu0 %v106
    %509 = vmatpush1.msra.mxu0 %v105
    %510 = vmatprep.subr.mxu0 %v111
    %511 = vmatpush1.msra.mxu0 %v110
    %512 = vmatprep.subr.mxu0 %v116
    %513 = vmatpush1.msra.mxu0 %v115
    %514 = vmatprep.subr.mxu0 %v121
    %515 = vmatpush1.msra.mxu0 %v120
    %516 = vmatprep.subr.mxu0 %v126
    %517 = vmatpush1.msra.mxu0 %v125
    %518 = vmatprep.subr.mxu0 %v131
    %519 = vmatpush1.msra.mxu0 %v130
    %520 = vmatprep.subr.mxu0 %v136
    %521 = vmatpush1.msra.mxu0 %v135
    %522 = vmatprep.subr.mxu0 %v141
    %523 = vmatpush1.msra.mxu0 %v140
    %524 = vmatprep.subr.mxu0 %v146
    %525 = vmatpush1.msra.mxu0 %v145
    %526 = vmatprep.subr.mxu0 %v151
    %527 = vmatpush1.msra.mxu0 %v150
    %528 = vmatprep.subr.mxu0 %v156
    %529 = vmatpush1.msra.mxu0 %v155
    %530 = vmatprep.subr.mxu0 %v161
    %531 = vmatpush1.msra.mxu0 %v160
    %532 = vmatprep.subr.mxu0 %v166
    %533 = vmatpush1.msra.mxu0 %v165
    %534 = vmatprep.subr.mxu0 %v171
    %535 = vmatpush1.msra.mxu0 %v170
    %536 = vmatprep.subr.mxu0 %v176
    %537 = vmatpush1.msra.mxu0 %v175
    %538 = vmatprep.subr.mxu0 %v181
    %539 = vmatpush1.msra.mxu0 %v180
    %540 = vmatprep.subr.mxu0 %v186
    %541 = vmatpush1.msra.mxu0 %v185
    %542 = vmatprep.subr.mxu0 %v191
    %543 = vmatpush1.msra.mxu0 %v190
    %544 = vmatprep.subr.mxu0 %v196
    %545 = vmatpush1.msra.mxu0 %v195
    %546 = vmatprep.subr.mxu0 %v201
    %547 = vmatpush1.msra.mxu0 %v200
    %548 = vmatprep.subr.mxu0 %v206
    %549 = vmatpush1.msra.mxu0 %v205
    %550 = vmatprep.subr.mxu0 %v211
    %551 = vmatpush1.msra.mxu0 %v210
    %552 = vmatprep.mubr.f32.mxu0 %v484
    %553 = vmatmul.mubr.f32.gmra.mrb[0].mxu0 %v52
    %v554 = vpop.f32.mrb[0].mxu0
    %v555 = vadd.f32 %v460, %v554
    %v556 = vpop.f32.mrb[0].mxu0
    %v557 = vadd.f32 %v464, %v556
    %558 = vdwg.mxu0
    %559 = vmatprep.subr.mxu0 %v216
    %560 = vmatpush1.msra.mxu0 %v215
    %561 = vmatprep.subr.mxu0 %v221
    %562 = vmatpush1.msra.mxu0 %v220
    %563 = vmatprep.subr.mxu0 %v226
    %564 = vmatpush1.msra.mxu0 %v225
    %565 = vmatprep.subr.mxu0 %v231
    %566 = vmatpush1.msra.mxu0 %v230
    %567 = vmatprep.subr.mxu0 %v236
    %568 = vmatpush1.msra.mxu0 %v235
    %569 = vmatprep.subr.mxu0 %v241
    %570 = vmatpush1.msra.mxu0 %v240
    %571 = vmatprep.subr.mxu0 %v246
    %572 = vmatpush1.msra.mxu0 %v245
    %573 = vmatprep.subr.mxu0 %v251
    %574 = vmatpush1.msra.mxu0 %v250
    %575 = vmatprep.subr.mxu0 %v256
    %576 = vmatpush1.msra.mxu0 %v255
    %577 = vmatprep.subr.mxu0 %v261
    %578 = vmatpush1.msra.mxu0 %v260
    %579 = vmatprep.subr.mxu0 %v266
    %580 = vmatpush1.msra.mxu0 %v265
    %581 = vmatprep.subr.mxu0 %v271
    %582 = vmatpush1.msra.mxu0 %v270
    %583 = vmatprep.subr.mxu0 %v276
    %584 = vmatpush1.msra.mxu0 %v275
    %585 = vmatprep.subr.mxu0 %v281
    %586 = vmatpush1.msra.mxu0 %v280
    %587 = vmatprep.subr.mxu0 %v286
    %588 = vmatpush1.msra.mxu0 %v285
    %589 = vmatprep.subr.mxu0 %v291
    %590 = vmatpush1.msra.mxu0 %v290
    %591 = vmatprep.subr.mxu0 %v296
    %592 = vmatpush1.msra.mxu0 %v295
    %593 = vmatprep.subr.mxu0 %v301
    %594 = vmatpush1.msra.mxu0 %v300
    %595 = vmatprep.subr.mxu0 %v306
    %596 = vmatpush1.msra.mxu0 %v305
    %597 = vmatprep.subr.mxu0 %v311
    %598 = vmatpush1.msra.mxu0 %v310
    %599 = vmatprep.subr.mxu0 %v316
    %600 = vmatpush1.msra.mxu0 %v315
    %601 = vmatprep.subr.mxu0 %v321
    %602 = vmatpush1.msra.mxu0 %v320
    %603 = vmatprep.subr.mxu0 %v326
    %604 = vmatpush1.msra.mxu0 %v325
    %605 = vmatprep.subr.mxu0 %v331
    %606 = vmatpush1.msra.mxu0 %v330
    %607 = vmatprep.subr.mxu0 %v336
    %608 = vmatpush1.msra.mxu0 %v335
    %609 = vmatprep.subr.mxu0 %v341
    %610 = vmatpush1.msra.mxu0 %v340
    %611 = vmatprep.subr.mxu0 %v346
    %612 = vmatpush1.msra.mxu0 %v345
    %613 = vmatprep.subr.mxu0 %v351
    %614 = vmatpush1.msra.mxu0 %v350
    %615 = vmatprep.subr.mxu0 %v356
    %616 = vmatpush1.msra.mxu0 %v355
    %617 = vmatprep.subr.mxu0 %v361
    %618 = vmatpush1.msra.mxu0 %v360
    %619 = vmatprep.subr.mxu0 %v366
    %620 = vmatpush1.msra.mxu0 %v365
    %621 = vmatprep.subr.mxu0 %v371
    %622 = vmatpush1.msra.mxu0 %v370
    %623 = vmatprep.mubr.f32.mxu0 %v485
    %624 = vmatmul.mubr.f32.gmra.mrb[0].mxu0 %v53
    %v625 = vpop.f32.mrb[0].mxu0
    %v626 = vadd.f32 %v555, %v625
    %v627 = vpop.f32.mrb[0].mxu0
    %v628 = vadd.f32 %v557, %v627
    %629 = vdwg.mxu0
    %630 = vmatprep.subr.mxu0 %v376
    %631 = vmatpush1.msra.mxu0 %v375
    %632 = vmatprep.subr.mxu0 %v381
    %633 = vmatpush1.msra.mxu0 %v380
    %634 = vmatprep.subr.mxu0 %v386
    %635 = vmatpush1.msra.mxu0 %v385
    %636 = vmatprep.subr.mxu0 %v391
    %637 = vmatpush1.msra.mxu0 %v390
    %638 = vmatprep.subr.mxu0 %v396
    %639 = vmatpush1.msra.mxu0 %v395
    %640 = vmatprep.subr.mxu0 %v401
    %641 = vmatpush1.msra.mxu0 %v400
    %642 = vmatprep.subr.mxu0 %v406
    %643 = vmatpush1.msra.mxu0 %v405
    %644 = vmatprep.subr.mxu0 %v411
    %645 = vmatpush1.msra.mxu0 %v410
    %646 = vmatprep.subr.mxu0 %v416
    %647 = vmatpush1.msra.mxu0 %v415
    %648 = vmatprep.subr.mxu0 %v421
    %649 = vmatpush1.msra.mxu0 %v420
    %650 = vmatprep.subr.mxu0 %v426
    %651 = vmatpush1.msra.mxu0 %v425
    %652 = vmatprep.subr.mxu0 %v431
    %653 = vmatpush1.msra.mxu0 %v430
    %654 = vmatprep.subr.mxu0 %v436
    %655 = vmatpush1.msra.mxu0 %v435
    %656 = vmatprep.subr.mxu0 %v441
    %657 = vmatpush1.msra.mxu0 %v440
    %658 = vmatprep.subr.mxu0 %v446
    %659 = vmatpush1.msra.mxu0 %v445
    %660 = vmatprep.subr.mxu0 %v451
    %661 = vmatpush1.msra.mxu0 %v450
    %662 = vmatprep.subr.mxu0 0.0
    %663 = vmatpush1.msra.mxu0 0.0
    %664 = vmatprep.subr.mxu0 0.0
    %665 = vmatpush1.msra.mxu0 0.0
    %666 = vmatprep.subr.mxu0 0.0
    %667 = vmatpush1.msra.mxu0 0.0
    %668 = vmatprep.subr.mxu0 0.0
    %669 = vmatpush1.msra.mxu0 0.0
    %670 = vmatprep.subr.mxu0 0.0
    %671 = vmatpush1.msra.mxu0 0.0
    %672 = vmatprep.subr.mxu0 0.0
    %673 = vmatpush1.msra.mxu0 0.0
    %674 = vmatprep.subr.mxu0 0.0
    %675 = vmatpush1.msra.mxu0 0.0
    %676 = vmatprep.subr.mxu0 0.0
    %677 = vmatpush1.msra.mxu0 0.0
    %678 = vmatprep.subr.mxu0 0.0
    %679 = vmatpush1.msra.mxu0 0.0
    %680 = vmatprep.subr.mxu0 0.0
    %681 = vmatpush1.msra.mxu0 0.0
    %682 = vmatprep.subr.mxu0 0.0
    %683 = vmatpush1.msra.mxu0 0.0
    %684 = vmatprep.subr.mxu0 0.0
    %685 = vmatpush1.msra.mxu0 0.0
    %686 = vmatprep.subr.mxu0 0.0
    %687 = vmatpush1.msra.mxu0 0.0
    %688 = vmatprep.subr.mxu0 0.0
    %689 = vmatpush1.msra.mxu0 0.0
    %690 = vmatprep.subr.mxu0 0.0
    %691 = vmatpush1.msra.mxu0 0.0
    %692 = vmatprep.subr.mxu0 0.0
    %693 = vmatpush1.msra.mxu0 0.0
    %694 = vmatprep.mubr.f32.mxu0 0.0
    %695 = vmatmul.mubr.f32.gmra.mrb[0].mxu0 %v54
    %v696 = vpop.f32.mrb[0].mxu0
    %v697 = vadd.f32 %v626, %v696
    %v698 = vpop.f32.mrb[0].mxu0
    %v699 = vadd.f32 %v628, %v698
    %700 = vdwg.mxu0
    %701 = vmatprep.subr.mxu0 %v58
    %702 = vmatpush1.msra.mxu0 %v57
    %703 = vmatprep.subr.mxu0 %v63
    %704 = vmatpush1.msra.mxu0 %v62
    %705 = vmatprep.subr.mxu0 %v68
    %706 = vmatpush1.msra.mxu0 %v67
    %707 = vmatprep.subr.mxu0 %v73
    %708 = vmatpush1.msra.mxu0 %v72
    %709 = vmatprep.subr.mxu0 %v78
    %710 = vmatpush1.msra.mxu0 %v77
    %711 = vmatprep.subr.mxu0 %v83
    %712 = vmatpush1.msra.mxu0 %v82
    %713 = vmatprep.subr.mxu0 %v88
    %714 = vmatpush1.msra.mxu0 %v87
    %715 = vmatprep.subr.mxu0 %v93
    %716 = vmatpush1.msra.mxu0 %v92
    %717 = vmatprep.subr.mxu0 %v98
    %718 = vmatpush1.msra.mxu0 %v97
    %719 = vmatprep.subr.mxu0 %v103
    %720 = vmatpush1.msra.mxu0 %v102
    %721 = vmatprep.subr.mxu0 %v108
    %722 = vmatpush1.msra.mxu0 %v107
    %723 = vmatprep.subr.mxu0 %v113
    %724 = vmatpush1.msra.mxu0 %v112
    %725 = vmatprep.subr.mxu0 %v118
    %726 = vmatpush1.msra.mxu0 %v117
    %727 = vmatprep.subr.mxu0 %v123
    %728 = vmatpush1.msra.mxu0 %v122
    %729 = vmatprep.subr.mxu0 %v128
    %730 = vmatpush1.msra.mxu0 %v127
    %731 = vmatprep.subr.mxu0 %v133
    %732 = vmatpush1.msra.mxu0 %v132
    %733 = vmatprep.subr.mxu0 %v138
    %734 = vmatpush1.msra.mxu0 %v137
    %735 = vmatprep.subr.mxu0 %v143
    %736 = vmatpush1.msra.mxu0 %v142
    %737 = vmatprep.subr.mxu0 %v148
    %738 = vmatpush1.msra.mxu0 %v147
    %739 = vmatprep.subr.mxu0 %v153
    %740 = vmatpush1.msra.mxu0 %v152
    %741 = vmatprep.subr.mxu0 %v158
    %742 = vmatpush1.msra.mxu0 %v157
    %743 = vmatprep.subr.mxu0 %v163
    %744 = vmatpush1.msra.mxu0 %v162
    %745 = vmatprep.subr.mxu0 %v168
    %746 = vmatpush1.msra.mxu0 %v167
    %747 = vmatprep.subr.mxu0 %v173
    %748 = vmatpush1.msra.mxu0 %v172
    %749 = vmatprep.subr.mxu0 %v178
    %750 = vmatpush1.msra.mxu0 %v177
    %751 = vmatprep.subr.mxu0 %v183
    %752 = vmatpush1.msra.mxu0 %v182
    %753 = vmatprep.subr.mxu0 %v188
    %754 = vmatpush1.msra.mxu0 %v187
    %755 = vmatprep.subr.mxu0 %v193
    %756 = vmatpush1.msra.mxu0 %v192
    %757 = vmatprep.subr.mxu0 %v198
    %758 = vmatpush1.msra.mxu0 %v197
    %759 = vmatprep.subr.mxu0 %v203
    %760 = vmatpush1.msra.mxu0 %v202
    %761 = vmatprep.subr.mxu0 %v208
    %762 = vmatpush1.msra.mxu0 %v207
    %763 = vmatprep.subr.mxu0 %v213
    %764 = vmatpush1.msra.mxu0 %v212
    %765 = vmatprep.mubr.f32.mxu0 %v484
    %766 = vmatmul.mubr.f32.gmra.mrb[0].mxu0 %v52
    %v767 = vpop.f32.mrb[0].mxu0
    %v768 = vadd.f32 %v468, %v767
    %v769 = vpop.f32.mrb[0].mxu0
    %v770 = vadd.f32 %v472, %v769
    %771 = vdwg.mxu0
    %772 = vmatprep.subr.mxu0 %v218
    %773 = vmatpush1.msra.mxu0 %v217
    %774 = vmatprep.subr.mxu0 %v223
    %775 = vmatpush1.msra.mxu0 %v222
    %776 = vmatprep.subr.mxu0 %v228
    %777 = vmatpush1.msra.mxu0 %v227
    %778 = vmatprep.subr.mxu0 %v233
    %779 = vmatpush1.msra.mxu0 %v232
    %780 = vmatprep.subr.mxu0 %v238
    %781 = vmatpush1.msra.mxu0 %v237
    %782 = vmatprep.subr.mxu0 %v243
    %783 = vmatpush1.msra.mxu0 %v242
    %784 = vmatprep.subr.mxu0 %v248
    %785 = vmatpush1.msra.mxu0 %v247
    %786 = vmatprep.subr.mxu0 %v253
    %787 = vmatpush1.msra.mxu0 %v252
    %788 = vmatprep.subr.mxu0 %v258
    %789 = vmatpush1.msra.mxu0 %v257
    %790 = vmatprep.subr.mxu0 %v263
    %791 = vmatpush1.msra.mxu0 %v262
    %792 = vmatprep.subr.mxu0 %v268
    %793 = vmatpush1.msra.mxu0 %v267
    %794 = vmatprep.subr.mxu0 %v273
    %795 = vmatpush1.msra.mxu0 %v272
    %796 = vmatprep.subr.mxu0 %v278
    %797 = vmatpush1.msra.mxu0 %v277
    %798 = vmatprep.subr.mxu0 %v283
    %799 = vmatpush1.msra.mxu0 %v282
    %800 = vmatprep.subr.mxu0 %v288
    %801 = vmatpush1.msra.mxu0 %v287
    %802 = vmatprep.subr.mxu0 %v293
    %803 = vmatpush1.msra.mxu0 %v292
    %804 = vmatprep.subr.mxu0 %v298
    %805 = vmatpush1.msra.mxu0 %v297
    %806 = vmatprep.subr.mxu0 %v303
    %807 = vmatpush1.msra.mxu0 %v302
    %808 = vmatprep.subr.mxu0 %v308
    %809 = vmatpush1.msra.mxu0 %v307
    %810 = vmatprep.subr.mxu0 %v313
    %811 = vmatpush1.msra.mxu0 %v312
    %812 = vmatprep.subr.mxu0 %v318
    %813 = vmatpush1.msra.mxu0 %v317
    %814 = vmatprep.subr.mxu0 %v323
    %815 = vmatpush1.msra.mxu0 %v322
    %816 = vmatprep.subr.mxu0 %v328
    %817 = vmatpush1.msra.mxu0 %v327
    %818 = vmatprep.subr.mxu0 %v333
    %819 = vmatpush1.msra.mxu0 %v332
    %820 = vmatprep.subr.mxu0 %v338
    %821 = vmatpush1.msra.mxu0 %v337
    %822 = vmatprep.subr.mxu0 %v343
    %823 = vmatpush1.msra.mxu0 %v342
    %824 = vmatprep.subr.mxu0 %v348
    %825 = vmatpush1.msra.mxu0 %v347
    %826 = vmatprep.subr.mxu0 %v353
    %827 = vmatpush1.msra.mxu0 %v352
    %828 = vmatprep.subr.mxu0 %v358
    %829 = vmatpush1.msra.mxu0 %v357
    %830 = vmatprep.subr.mxu0 %v363
    %831 = vmatpush1.msra.mxu0 %v362
    %832 = vmatprep.subr.mxu0 %v368
    %833 = vmatpush1.msra.mxu0 %v367
    %834 = vmatprep.subr.mxu0 %v373
    %835 = vmatpush1.msra.mxu0 %v372
    %836 = vmatprep.mubr.f32.mxu0 %v485
    %837 = vmatmul.mubr.f32.gmra.mrb[0].mxu0 %v53
    %v838 = vpop.f32.mrb[0].mxu0
    %v839 = vadd.f32 %v768, %v838
    %v840 = vpop.f32.mrb[0].mxu0
    %v841 = vadd.f32 %v770, %v840
    %842 = vdwg.mxu0
    %843 = vmatprep.subr.mxu0 %v378
    %844 = vmatpush1.msra.mxu0 %v377
    %845 = vmatprep.subr.mxu0 %v383
    %846 = vmatpush1.msra.mxu0 %v382
    %847 = vmatprep.subr.mxu0 %v388
    %848 = vmatpush1.msra.mxu0 %v387
    %849 = vmatprep.subr.mxu0 %v393
    %850 = vmatpush1.msra.mxu0 %v392
    %851 = vmatprep.subr.mxu0 %v398
    %852 = vmatpush1.msra.mxu0 %v397
    %853 = vmatprep.subr.mxu0 %v403
    %854 = vmatpush1.msra.mxu0 %v402
    %855 = vmatprep.subr.mxu0 %v408
    %856 = vmatpush1.msra.mxu0 %v407
    %857 = vmatprep.subr.mxu0 %v413
    %858 = vmatpush1.msra.mxu0 %v412
    %859 = vmatprep.subr.mxu0 %v418
    %860 = vmatpush1.msra.mxu0 %v417
    %861 = vmatprep.subr.mxu0 %v423
    %862 = vmatpush1.msra.mxu0 %v422
    %863 = vmatprep.subr.mxu0 %v428
    %864 = vmatpush1.msra.mxu0 %v427
    %865 = vmatprep.subr.mxu0 %v433
    %866 = vmatpush1.msra.mxu0 %v432
    %867 = vmatprep.subr.mxu0 %v438
    %868 = vmatpush1.msra.mxu0 %v437
    %869 = vmatprep.subr.mxu0 %v443
    %870 = vmatpush1.msra.mxu0 %v442
    %871 = vmatprep.subr.mxu0 %v448
    %872 = vmatpush1.msra.mxu0 %v447
    %873 = vmatprep.subr.mxu0 %v453
    %874 = vmatpush1.msra.mxu0 %v452
    %875 = vmatprep.subr.mxu0 0.0
    %876 = vmatpush1.msra.mxu0 0.0
    %877 = vmatprep.subr.mxu0 0.0
    %878 = vmatpush1.msra.mxu0 0.0
    %879 = vmatprep.subr.mxu0 0.0
    %880 = vmatpush1.msra.mxu0 0.0
    %881 = vmatprep.subr.mxu0 0.0
    %882 = vmatpush1.msra.mxu0 0.0
    %883 = vmatprep.subr.mxu0 0.0
    %884 = vmatpush1.msra.mxu0 0.0
    %885 = vmatprep.subr.mxu0 0.0
    %886 = vmatpush1.msra.mxu0 0.0
    %887 = vmatprep.subr.mxu0 0.0
    %888 = vmatpush1.msra.mxu0 0.0
    %889 = vmatprep.subr.mxu0 0.0
    %890 = vmatpush1.msra.mxu0 0.0
    %891 = vmatprep.subr.mxu0 0.0
    %892 = vmatpush1.msra.mxu0 0.0
    %893 = vmatprep.subr.mxu0 0.0
    %894 = vmatpush1.msra.mxu0 0.0
    %895 = vmatprep.subr.mxu0 0.0
    %896 = vmatpush1.msra.mxu0 0.0
    %897 = vmatprep.subr.mxu0 0.0
    %898 = vmatpush1.msra.mxu0 0.0
    %899 = vmatprep.subr.mxu0 0.0
    %900 = vmatpush1.msra.mxu0 0.0
    %901 = vmatprep.subr.mxu0 0.0
    %902 = vmatpush1.msra.mxu0 0.0
    %903 = vmatprep.subr.mxu0 0.0
    %904 = vmatpush1.msra.mxu0 0.0
    %905 = vmatprep.subr.mxu0 0.0
    %906 = vmatpush1.msra.mxu0 0.0
    %907 = vmatprep.mubr.f32.mxu0 0.0
    %908 = vmatmul.mubr.f32.gmra.mrb[0].mxu0 %v54
    %v909 = vpop.f32.mrb[0].mxu0
    %v910 = vadd.f32 %v839, %v909
    %v911 = vpop.f32.mrb[0].mxu0
    %v912 = vadd.f32 %v841, %v911
    %913 = vdwg.mxu0
    %914 = vmatprep.subr.mxu0 0.0
    %915 = vmatpush1.msra.mxu0 %v59
    %916 = vmatprep.subr.mxu0 0.0
    %917 = vmatpush1.msra.mxu0 %v64
    %918 = vmatprep.subr.mxu0 0.0
    %919 = vmatpush1.msra.mxu0 %v69
    %920 = vmatprep.subr.mxu0 0.0
    %921 = vmatpush1.msra.mxu0 %v74
    %922 = vmatprep.subr.mxu0 0.0
    %923 = vmatpush1.msra.mxu0 %v79
    %924 = vmatprep.subr.mxu0 0.0
    %925 = vmatpush1.msra.mxu0 %v84
    %926 = vmatprep.subr.mxu0 0.0
    %927 = vmatpush1.msra.mxu0 %v89
    %928 = vmatprep.subr.mxu0 0.0
    %929 = vmatpush1.msra.mxu0 %v94
    %930 = vmatprep.subr.mxu0 0.0
    %931 = vmatpush1.msra.mxu0 %v99
    %932 = vmatprep.subr.mxu0 0.0
    %933 = vmatpush1.msra.mxu0 %v104
    %934 = vmatprep.subr.mxu0 0.0
    %935 = vmatpush1.msra.mxu0 %v109
    %936 = vmatprep.subr.mxu0 0.0
    %937 = vmatpush1.msra.mxu0 %v114
    %938 = vmatprep.subr.mxu0 0.0
    %939 = vmatpush1.msra.mxu0 %v119
    %940 = vmatprep.subr.mxu0 0.0
    %941 = vmatpush1.msra.mxu0 %v124
    %942 = vmatprep.subr.mxu0 0.0
    %943 = vmatpush1.msra.mxu0 %v129
    %944 = vmatprep.subr.mxu0 0.0
    %945 = vmatpush1.msra.mxu0 %v134
    %946 = vmatprep.subr.mxu0 0.0
    %947 = vmatpush1.msra.mxu0 %v139
    %948 = vmatprep.subr.mxu0 0.0
    %949 = vmatpush1.msra.mxu0 %v144
    %950 = vmatprep.subr.mxu0 0.0
    %951 = vmatpush1.msra.mxu0 %v149
    %952 = vmatprep.subr.mxu0 0.0
    %953 = vmatpush1.msra.mxu0 %v154
    %954 = vmatprep.subr.mxu0 0.0
    %955 = vmatpush1.msra.mxu0 %v159
    %956 = vmatprep.subr.mxu0 0.0
    %957 = vmatpush1.msra.mxu0 %v164
    %958 = vmatprep.subr.mxu0 0.0
    %959 = vmatpush1.msra.mxu0 %v169
    %960 = vmatprep.subr.mxu0 0.0
    %961 = vmatpush1.msra.mxu0 %v174
    %962 = vmatprep.subr.mxu0 0.0
    %963 = vmatpush1.msra.mxu0 %v179
    %964 = vmatprep.subr.mxu0 0.0
    %965 = vmatpush1.msra.mxu0 %v184
    %966 = vmatprep.subr.mxu0 0.0
    %967 = vmatpush1.msra.mxu0 %v189
    %968 = vmatprep.subr.mxu0 0.0
    %969 = vmatpush1.msra.mxu0 %v194
    %970 = vmatprep.subr.mxu0 0.0
    %971 = vmatpush1.msra.mxu0 %v199
    %972 = vmatprep.subr.mxu0 0.0
    %973 = vmatpush1.msra.mxu0 %v204
    %974 = vmatprep.subr.mxu0 0.0
    %975 = vmatpush1.msra.mxu0 %v209
    %976 = vmatprep.subr.mxu0 0.0
    %977 = vmatpush1.msra.mxu0 %v214
    %978 = vmatprep.mubr.f32.mxu0 %v484
    %979 = vmatmul.mubr.f32.gmra.mrb[0].mxu0 %v52
    %v980 = vpop.f32.mrb[0].mxu0
    %v981 = vadd.f32 %v476, %v980
    %v982 = vpop.f32.mrb[0].mxu0
    %983 = vdwg.mxu0
    %984 = vmatprep.subr.mxu0 0.0
    %985 = vmatpush1.msra.mxu0 %v219
    %986 = vmatprep.subr.mxu0 0.0
    %987 = vmatpush1.msra.mxu0 %v224
    %988 = vmatprep.subr.mxu0 0.0
    %989 = vmatpush1.msra.mxu0 %v229
    %990 = vmatprep.subr.mxu0 0.0
    %991 = vmatpush1.msra.mxu0 %v234
    %992 = vmatprep.subr.mxu0 0.0
    %993 = vmatpush1.msra.mxu0 %v239
    %994 = vmatprep.subr.mxu0 0.0
    %995 = vmatpush1.msra.mxu0 %v244
    %996 = vmatprep.subr.mxu0 0.0
    %997 = vmatpush1.msra.mxu0 %v249
    %998 = vmatprep.subr.mxu0 0.0
    %999 = vmatpush1.msra.mxu0 %v254
    %1000 = vmatprep.subr.mxu0 0.0
    %1001 = vmatpush1.msra.mxu0 %v259
    %1002 = vmatprep.subr.mxu0 0.0
    %1003 = vmatpush1.msra.mxu0 %v264
    %1004 = vmatprep.subr.mxu0 0.0
    %1005 = vmatpush1.msra.mxu0 %v269
    %1006 = vmatprep.subr.mxu0 0.0
    %1007 = vmatpush1.msra.mxu0 %v274
    %1008 = vmatprep.subr.mxu0 0.0
    %1009 = vmatpush1.msra.mxu0 %v279
    %1010 = vmatprep.subr.mxu0 0.0
    %1011 = vmatpush1.msra.mxu0 %v284
    %1012 = vmatprep.subr.mxu0 0.0
    %1013 = vmatpush1.msra.mxu0 %v289
    %1014 = vmatprep.subr.mxu0 0.0
    %1015 = vmatpush1.msra.mxu0 %v294
    %1016 = vmatprep.subr.mxu0 0.0
    %1017 = vmatpush1.msra.mxu0 %v299
    %1018 = vmatprep.subr.mxu0 0.0
    %1019 = vmatpush1.msra.mxu0 %v304
    %1020 = vmatprep.subr.mxu0 0.0
    %1021 = vmatpush1.msra.mxu0 %v309
    %1022 = vmatprep.subr.mxu0 0.0
    %1023 = vmatpush1.msra.mxu0 %v314
    %1024 = vmatprep.subr.mxu0 0.0
    %1025 = vmatpush1.msra.mxu0 %v319
    %1026 = vmatprep.subr.mxu0 0.0
    %1027 = vmatpush1.msra.mxu0 %v324
    %1028 = vmatprep.subr.mxu0 0.0
    %1029 = vmatpush1.msra.mxu0 %v329
    %1030 = vmatprep.subr.mxu0 0.0
    %1031 = vmatpush1.msra.mxu0 %v334
    %1032 = vmatprep.subr.mxu0 0.0
    %1033 = vmatpush1.msra.mxu0 %v339
    %1034 = vmatprep.subr.mxu0 0.0
    %1035 = vmatpush1.msra.mxu0 %v344
    %1036 = vmatprep.subr.mxu0 0.0
    %1037 = vmatpush1.msra.mxu0 %v349
    %1038 = vmatprep.subr.mxu0 0.0
    %1039 = vmatpush1.msra.mxu0 %v354
    %1040 = vmatprep.subr.mxu0 0.0
    %1041 = vmatpush1.msra.mxu0 %v359
    %1042 = vmatprep.subr.mxu0 0.0
    %1043 = vmatpush1.msra.mxu0 %v364
    %1044 = vmatprep.subr.mxu0 0.0
    %1045 = vmatpush1.msra.mxu0 %v369
    %1046 = vmatprep.subr.mxu0 0.0
    %1047 = vmatpush1.msra.mxu0 %v374
    %1048 = vmatprep.mubr.f32.mxu0 %v485
    %1049 = vmatmul.mubr.f32.gmra.mrb[0].mxu0 %v53
    %v1050 = vpop.f32.mrb[0].mxu0
    %v1051 = vadd.f32 %v981, %v1050
    %v1052 = vpop.f32.mrb[0].mxu0
    %1053 = vdwg.mxu0
    %1054 = vmatprep.subr.mxu0 0.0
    %1055 = vmatpush1.msra.mxu0 %v379
    %1056 = vmatprep.subr.mxu0 0.0
    %1057 = vmatpush1.msra.mxu0 %v384
    %1058 = vmatprep.subr.mxu0 0.0
    %1059 = vmatpush1.msra.mxu0 %v389
    %1060 = vmatprep.subr.mxu0 0.0
    %1061 = vmatpush1.msra.mxu0 %v394
    %1062 = vmatprep.subr.mxu0 0.0
    %1063 = vmatpush1.msra.mxu0 %v399
    %1064 = vmatprep.subr.mxu0 0.0
    %1065 = vmatpush1.msra.mxu0 %v404
    %1066 = vmatprep.subr.mxu0 0.0
    %1067 = vmatpush1.msra.mxu0 %v409
    %1068 = vmatprep.subr.mxu0 0.0
    %1069 = vmatpush1.msra.mxu0 %v414
    %1070 = vmatprep.subr.mxu0 0.0
    %1071 = vmatpush1.msra.mxu0 %v419
    %1072 = vmatprep.subr.mxu0 0.0
    %1073 = vmatpush1.msra.mxu0 %v424
    %1074 = vmatprep.subr.mxu0 0.0
    %1075 = vmatpush1.msra.mxu0 %v429
    %1076 = vmatprep.subr.mxu0 0.0
    %1077 = vmatpush1.msra.mxu0 %v434
    %1078 = vmatprep.subr.mxu0 0.0
    %1079 = vmatpush1.msra.mxu0 %v439
    %1080 = vmatprep.subr.mxu0 0.0
    %1081 = vmatpush1.msra.mxu0 %v444
    %1082 = vmatprep.subr.mxu0 0.0
    %1083 = vmatpush1.msra.mxu0 %v449
    %1084 = vmatprep.subr.mxu0 0.0
    %1085 = vmatpush1.msra.mxu0 %v454
    %1086 = vmatprep.subr.mxu0 0.0
    %1087 = vmatpush1.msra.mxu0 0.0
    %1088 = vmatprep.subr.mxu0 0.0
    %1089 = vmatpush1.msra.mxu0 0.0
    %1090 = vmatprep.subr.mxu0 0.0
    %1091 = vmatpush1.msra.mxu0 0.0
    %1092 = vmatprep.subr.mxu0 0.0
    %1093 = vmatpush1.msra.mxu0 0.0
    %1094 = vmatprep.subr.mxu0 0.0
    %1095 = vmatpush1.msra.mxu0 0.0
    %1096 = vmatprep.subr.mxu0 0.0
    %1097 = vmatpush1.msra.mxu0 0.0
    %1098 = vmatprep.subr.mxu0 0.0
    %1099 = vmatpush1.msra.mxu0 0.0
    %1100 = vmatprep.subr.mxu0 0.0
    %1101 = vmatpush1.msra.mxu0 0.0
    %1102 = vmatprep.subr.mxu0 0.0
    %1103 = vmatpush1.msra.mxu0 0.0
    %1104 = vmatprep.subr.mxu0 0.0
    %1105 = vmatpush1.msra.mxu0 0.0
    %1106 = vmatprep.subr.mxu0 0.0
    %1107 = vmatpush1.msra.mxu0 0.0
    %1108 = vmatprep.subr.mxu0 0.0
    %1109 = vmatpush1.msra.mxu0 0.0
    %1110 = vmatprep.subr.mxu0 0.0
    %1111 = vmatpush1.msra.mxu0 0.0
    %1112 = vmatprep.subr.mxu0 0.0
    %1113 = vmatpush1.msra.mxu0 0.0
    %1114 = vmatprep.subr.mxu0 0.0
    %1115 = vmatpush1.msra.mxu0 0.0
    %1116 = vmatprep.subr.mxu0 0.0
    %1117 = vmatpush1.msra.mxu0 0.0
    %1118 = vmatprep.mubr.f32.mxu0 0.0
    %1119 = vmatmul.mubr.f32.gmra.mrb[0].mxu0 %v54
    %v1120 = vpop.f32.mrb[0].mxu0
    %v1121 = vadd.f32 %v1051, %v1120
    %v1122 = vpop.f32.mrb[0].mxu0
    %1123 = vdwg.mxu0
    %v1128 = vcombine.low %v697, %v699
    %v1129 = vcombine.low %v910, %v912
    %1132 = vst [vmem:[#allocation8] sm:$0xff] %v1128
    %1133 = vst [vmem:[#allocation8 + $0x8] sm:$0xff] %v1129
    %1134 = vst [vmem:[#allocation8 + $0x10] sm:$0xf] %v1121
    // Predicated region
    $region26: #{tpu_custom_call.1} parent=1 // pred_check
      _
    $region27: #{tpu_custom_call.1} parent=1 // pred_check_branch
      %1136 = sbr.rel (0) target = $region29
    $region28: #{tpu_custom_call.1} parent=1 // pred_region
      %s1138 = ssub.s32 320, 320
      %1139 = vsyncadd [#allocation4], %s1138
      %s1141 = sshll.u32 [#allocation8], 4
      %s1142 = int_to_ptr.vmem [resolvable:$true] %s1141
      %1144 = dma.vmem_to_hbm [thread:$0]  %s1142, 320, %s3, [#allocation4]
    $region29: #{tpu_custom_call.1} parent=1 // pred_fallthru
      _
    // Predicated region
    $region30: #{tpu_custom_call.1} parent=1 // pred_check
      _
    $region31: #{tpu_custom_call.1} parent=1 // pred_check_branch
      %1146 = sbr.rel (0) target = $region33
    $region32: #{tpu_custom_call.1} parent=1 // pred_region
      %1147 = dma.done [#allocation4], 320
    $region33: #{tpu_custom_call.1} parent=1 // pred_fallthru
      _
    %1148 = vsyncpa [#allocation3], 1
    %1149 = vsyncpa [#allocation6], 1
    %1150 = vsyncpa [#allocation4], 1

</llo_original>
